<compile_context>
chip_gen: v7x
topology: tpu7x:2x2x1
jax: 0.10.0
libtpu: 0.0.40
codegen_flags: <defaults>
</compile_context>

<pallas_src>
import jax
import jax.numpy as jnp
from jax.experimental import pallas as pl
from jax.experimental.pallas import tpu as pltpu

EPS = 1e-15

_MIN_ELEMS_FOR_PALLAS = 16384   # below this, fused XLA is faster than a kernel
_DEFAULT_BLOCK_B = 512          # batch rows per tile (multiple of 8)
_DEFAULT_BLOCK_C = 1024         # classes per tile  (multiple of 128)


def _round_up(x, m):
    return (x + m - 1) // m * m


def _ce_rows_kernel(pred_ref, tgt_ref, row_ref):
    """Accumulates -sum(t * log(p)) over class tiles into row_ref (TB, 1)."""
    k = pl.program_id(1)

    @pl.when(k == 0)
    def _init():
        row_ref[...] = jnp.zeros_like(row_ref)

    # Upcast to f32 in-kernel (inputs may be bf16 to halve HBM bytes).
    p = jnp.clip(pred_ref[...].astype(jnp.float32), EPS, 1.0 - EPS)
    t = jnp.clip(tgt_ref[...].astype(jnp.float32), EPS, 1.0 - EPS)
    row_ref[...] += -jnp.sum(t * jnp.log(p), axis=1, keepdims=True)


def _ce_rows_pallas(pred, target, block_b, block_c):
    B, C = pred.shape
    tb = min(block_b, _round_up(B, 8))
    tc = min(block_c, _round_up(C, 128))
    bp = _round_up(B, tb)
    cp = _round_up(C, tc)

    if (bp, cp) != (B, C):
        # Pad pred with 1.0 (log -> 0) and target with 0.0 so padded
        # rows/columns contribute exactly zero cross entropy (no NaN/Inf).
        pred = jnp.pad(pred, ((0, bp - B), (0, cp - C)), constant_values=1.0)
        target = jnp.pad(target, ((0, bp - B), (0, cp - C)), constant_values=0.0)

    grid = (bp // tb, cp // tc)
    rows = pl.pallas_call(
        _ce_rows_kernel,
        out_shape=jax.ShapeDtypeStruct((bp, 1), jnp.float32),
        grid=grid,
        in_specs=[
            pl.BlockSpec((tb, tc), lambda i, k: (i, k)),
            pl.BlockSpec((tb, tc), lambda i, k: (i, k)),
        ],
        out_specs=pl.BlockSpec((tb, 1), lambda i, k: (i, 0)),
        compiler_params=pltpu.CompilerParams(
            dimension_semantics=("parallel", "arbitrary"),
        ),
    )(pred, target)
    return rows[:B, 0]


def _ce_rows_xla(pred, target):
    p = jnp.clip(pred.astype(jnp.float32), EPS, 1.0 - EPS)
    t = jnp.clip(target.astype(jnp.float32), EPS, 1.0 - EPS)
    return -jnp.sum(t * jnp.log(p), axis=1)


def prob_distrib_cross_entropy_loss(pred, target, keep_batch_dim=False, *,
                                    block_b=_DEFAULT_BLOCK_B,
                                    block_c=_DEFAULT_BLOCK_C):
    """JAX/Pallas equivalent of ProbDistribCrossEntropyLoss.forward."""
    assert pred.shape == target.shape and pred.ndim == 2
    B, C = pred.shape

    if B * C < _MIN_ELEMS_FOR_PALLAS:
        # Toy shapes: per-step + custom-call overhead dominates; let XLA fuse.
        rows = _ce_rows_xla(pred, target)
    else:
        rows = _ce_rows_pallas(pred, target, block_b, block_c)

    if keep_batch_dim:
        return rows                 # shape (B,), matches torch's reduced dim=1
    return jnp.mean(rows)           # scalar mean computed in the wrapper


def _reference(pred, target, keep_batch_dim=False):
    p = jnp.clip(pred.astype(jnp.float32), EPS, 1.0 - EPS)
    t = jnp.clip(target.astype(jnp.float32), EPS, 1.0 - EPS)
    ce = -jnp.sum(t * jnp.log(p), axis=1)
    return ce if keep_batch_dim else ce.mean()


if __name__ == "__main__":
    key = jax.random.PRNGKey(0)
    k1, k2, k3, k4, k5, k6 = jax.random.split(key, 6)

    # Case 1: large enough to take the Pallas path; small block sizes force a
    # multi-step grid that exercises both the batch tiling ("parallel") and
    # the class-axis accumulation ("arbitrary").
    B1, C1 = 64, 384
    pred1 = jax.nn.softmax(jax.random.normal(k1, (B1, C1), jnp.float32), axis=1)
    tgt1 = jax.nn.softmax(jax.random.normal(k2, (B1, C1), jnp.float32), axis=1)
    loss1 = prob_distrib_cross_entropy_loss(pred1, tgt1, block_b=16, block_c=128)
    rows1 = prob_distrib_cross_entropy_loss(pred1, tgt1, keep_batch_dim=True,
                                            block_b=16, block_c=128)
    jax.block_until_ready((loss1, rows1))
    assert jnp.allclose(loss1, _reference(pred1, tgt1), rtol=1e-5, atol=1e-6)
    assert jnp.allclose(rows1, _reference(pred1, tgt1, True),
                        rtol=1e-5, atol=1e-6)

    # Case 2: non-divisible shape — exercises the wrapper-side padding path.
    B2, C2 = 72, 333
    pred2 = jax.nn.softmax(jax.random.normal(k3, (B2, C2), jnp.float32), axis=1)
    tgt2 = jax.nn.softmax(jax.random.normal(k4, (B2, C2), jnp.float32), axis=1)
    loss2 = prob_distrib_cross_entropy_loss(pred2, tgt2, block_b=16, block_c=128)
    rows2 = prob_distrib_cross_entropy_loss(pred2, tgt2, keep_batch_dim=True,
                                            block_b=16, block_c=128)
    jax.block_until_ready((loss2, rows2))
    assert jnp.allclose(loss2, _reference(pred2, tgt2), rtol=1e-5, atol=1e-6)
    assert jnp.allclose(rows2, _reference(pred2, tgt2, True),
                        rtol=1e-5, atol=1e-6)

    # Case 3: toy shape — goes through the fused-XLA fallback.
    B3, C3 = 8, 32
    pred3 = jax.nn.softmax(jax.random.normal(k5, (B3, C3), jnp.float32), axis=1)
    tgt3 = jax.nn.softmax(jax.random.normal(k6, (B3, C3), jnp.float32), axis=1)
    loss3 = prob_distrib_cross_entropy_loss(pred3, tgt3)
    jax.block_until_ready(loss3)
    assert jnp.allclose(loss3, _reference(pred3, tgt3), rtol=1e-5, atol=1e-6)

    print("KERNEL_OK")
</pallas_src>

<mosaic_0001>
module attributes {stable_mosaic.version = 11 : i64} {
  func.func @_ce_rows_kernel(%arg0: i32, %arg1: i32, %arg2: memref<16x128xf32, #tpu.memory_space<vmem>>, %arg3: memref<16x128xf32, #tpu.memory_space<vmem>>, %arg4: memref<16x1xf32, #tpu.memory_space<vmem>>) attributes {dimension_semantics = [#tpu.dimension_semantics<parallel>, #tpu.dimension_semantics<arbitrary>], iteration_bounds = array<i64: 4, 3>, scalar_prefetch = 0 : i64, scratch_operands = 0 : i64, tpu.core_type = #tpu.core_type<tc>, window_params = [{transform_indices = @transform_0, window_bounds = array<i64: 16, 128>}, {transform_indices = @transform_1, window_bounds = array<i64: 16, 128>}, {transform_indices = @transform_2, window_bounds = array<i64: 16, 1>}]} {
    %c0_i32 = arith.constant 0 : i32
    %0 = arith.cmpi eq, %arg1, %c0_i32 : i32
    %1 = arith.extui %0 : i1 to i32
    %c0_i32_0 = arith.constant 0 : i32
    %2 = arith.cmpi ne, %1, %c0_i32_0 : i32
    scf.if %2 {
      %cst_13 = arith.constant 0.000000e+00 : f32
      %22 = vector.broadcast %cst_13 : f32 to vector<16x1xf32>
      %c0_14 = arith.constant 0 : index
      %c0_15 = arith.constant 0 : index
      %23 = vector.load %arg4[%c0_14, %c0_15] : memref<16x1xf32, #tpu.memory_space<vmem>>, vector<16x1xf32>
      tpu.vector_store %arg4[%c0_14, %c0_15], %22 {strides = array<i32>} : memref<16x1xf32, #tpu.memory_space<vmem>>, vector<16x1xf32>,
    } else {
    }
    %c0 = arith.constant 0 : index
    %c0_1 = arith.constant 0 : index
    %3 = vector.load %arg2[%c0, %c0_1] : memref<16x128xf32, #tpu.memory_space<vmem>>, vector<16x128xf32>
    %cst = arith.constant 1.000000e-15 : f32
    %cst_2 = arith.constant 1.000000e+00 : f32
    %4 = vector.broadcast %cst : f32 to vector<16x128xf32>
    %5 = arith.maximumf %4, %3 : vector<16x128xf32>
    %6 = vector.broadcast %cst_2 : f32 to vector<16x128xf32>
    %7 = arith.minimumf %6, %5 : vector<16x128xf32>
    %c0_3 = arith.constant 0 : index
    %c0_4 = arith.constant 0 : index
    %8 = vector.load %arg3[%c0_3, %c0_4] : memref<16x128xf32, #tpu.memory_space<vmem>>, vector<16x128xf32>
    %cst_5 = arith.constant 1.000000e-15 : f32
    %cst_6 = arith.constant 1.000000e+00 : f32
    %9 = vector.broadcast %cst_5 : f32 to vector<16x128xf32>
    %10 = arith.maximumf %9, %8 : vector<16x128xf32>
    %11 = vector.broadcast %cst_6 : f32 to vector<16x128xf32>
    %12 = arith.minimumf %11, %10 : vector<16x128xf32>
    %c0_7 = arith.constant 0 : index
    %c0_8 = arith.constant 0 : index
    %13 = vector.load %arg4[%c0_7, %c0_8] : memref<16x1xf32, #tpu.memory_space<vmem>>, vector<16x1xf32>
    %14 = math.log %7 : vector<16x128xf32>
    %15 = arith.mulf %12, %14 : vector<16x128xf32>
    %cst_9 = arith.constant dense<0.000000e+00> : vector<16xf32>
    %16 = vector.multi_reduction <add>, %15, %cst_9 [1] : vector<16x128xf32> to vector<16xf32>
    %17 = vector.shape_cast %16 : vector<16xf32> to vector<16x1xf32>
    %cst_10 = arith.constant 0.000000e+00 : f32
    %18 = vector.broadcast %cst_10 : f32 to vector<16x1xf32>
    %19 = arith.subf %18, %17 : vector<16x1xf32>
    %20 = arith.addf %13, %19 : vector<16x1xf32>
    %c0_11 = arith.constant 0 : index
    %c0_12 = arith.constant 0 : index
    %21 = vector.load %arg4[%c0_11, %c0_12] : memref<16x1xf32, #tpu.memory_space<vmem>>, vector<16x1xf32>
    tpu.vector_store %arg4[%c0_11, %c0_12], %20 {strides = array<i32>} : memref<16x1xf32, #tpu.memory_space<vmem>>, vector<16x1xf32>,
    return
  }
  func.func @transform_0(%arg0: i32, %arg1: i32) -> (i32, i32) {
    %c0_i32 = arith.constant 0 : i32
    return %arg0, %arg1 : i32, i32
  }
  func.func @transform_1(%arg0: i32, %arg1: i32) -> (i32, i32) {
    %c0_i32 = arith.constant 0 : i32
    return %arg0, %arg1 : i32, i32
  }
  func.func @transform_2(%arg0: i32, %arg1: i32) -> (i32, i32) {
    %c0_i32 = arith.constant 0 : i32
    %c0_i32_0 = arith.constant 0 : i32
    return %arg0, %c0_i32 : i32, i32
  }
}

</mosaic_0001>

<llo_original>
// kernel: tpu_custom_call.1
$region0: #{tpu_custom_call.1}
  #allocation0 [shape = 'u32[]', space=smem, size = 0x4, offset = 0x4, fixed_abs, tag = 'smem constant byte address 0x4 - core index']
  #allocation1 [shape = 'u32[144,128]{1,0:T(1,128)}', space=vmem, size = 0x12000, scoped, tag = 'internal scratch']
  %s0 = inlined_call_operand.hbm [shape: f32[64,384], index: 0, kind: input, shape index: {}]
  %s1 = inlined_call_operand.hbm [shape: f32[64,384], index: 1, kind: input, shape index: {}]
  %s2 = inlined_call_operand.vmem [shape: f32[64,1], index: 2, kind: output, shape index: {}]
  %s3 = sld [smem:[#allocation0]]
  $region53: #{tpu_custom_call.1} parent=0
    _
  %s5 = ssub.s32 1, %s3
  %s6 = scalar_select 0, %s5, %s3
  $region1: #{tpu_custom_call.1} parent=0
    #allocation2 [shape = 'u8[16384]{0}', space=vmem, size = 0x4000, scoped, tag = 'input window, operand 0']
    #allocation3 [shape = 's32[2]{0}', space=sflag, size = 0x8, scoped, tag = 'scoped memory for tpu_custom_call.1']
    #allocation4 [shape = 'u8[16384]{0}', space=vmem, size = 0x4000, scoped, tag = 'input window, operand 1']
    #allocation5 [shape = 's32[2]{0}', space=sflag, size = 0x8, scoped, tag = 'scoped memory for tpu_custom_call.1']
    %7 = vsyncpa [#allocation3], 0
    %s8 = scalar_lea.sflag [#allocation3], 1
    %9 = vsyncpa %s8, 0
    %10 = vsyncpa [#allocation5], 0
    %s11 = scalar_lea.sflag [#allocation5], 1
    %12 = vsyncpa %s11, 0
    loop: start=0, step=1, limit=14
    $region2: #{tpu_custom_call.1} parent=1 // loop_pre_header
      _
    $region3: #{tpu_custom_call.1} parent=1 // loop_header
      %s14 = sphi 0, %s18
      %p15 = scmp.ge.s32.totalorder %s14, 14
      %s21 = sphi 0, %s33
      %s22 = sphi 0, %s29
      %s23 = sphi 0, %s21
      %s24 = sphi 0, %s22
      %s25 = sphi 0, %s23
      %s26 = sphi 0, %s24
      %s38 = sphi 0, %s40
      %s41 = sphi 0, %s38
      %s42 = sphi 0, %s41
      %s58 = sphi 0, %s42
      %s66 = sphi 0, %s68
      %s69 = sphi 0, %s66
      %s70 = sphi 0, %s69
      %s86 = sphi 0, %s70
      %s92 = sphi 0, %s94
      %s95 = sphi 0, %s92
      %s96 = sphi 0, %s95
      %s112 = sphi 0, %s96
    $region4: #{tpu_custom_call.1} parent=1 // loop_header_branch
      %17 = sbr.rel (%p15) target = $region8
    $region5: #{tpu_custom_call.1} parent=1 // loop_body
      %s19 = ssub.s32 %s14, 1
      %s20 = ssub.s32 %s14, 2
      %s27 = sadd.s32 1, %s22
      %p28 = scmp.ge.s32.totalorder %s27, 3
      %s29 = scalar_select %p28, 0, %s27
      %s30 = sadd.s32 1, %s21
      %s31 = scalar_select %p28, %s30, %s21
      %p32 = scmp.ge.s32.totalorder %s31, 4
      %s33 = scalar_select %p32, 0, %s31
      %s34 = ssub.s32 %s21, %s33
      %s35 = ssub.s32 %s22, %s29
      %s36 = sor.u32 %s34, %s35
      %p37 = scmp.eq.s32.totalorder %s36, 0
      %s39 = sadd.s32 %s38, 1
      %s40 = scalar_select %p37, %s38, %s39
      %p43 = pneg %p37
      %p44 = scmp.eq.s32.totalorder %s14, 11
      %p45 = por %p43, %p44
      %p46 = scmp.ne.s32.totalorder %s38, %s41
      %p47 = scmp.eq.s32.totalorder %s14, 0
      %p48 = por %p46, %p47
      %p49 = scmp.ne.s32.totalorder %s38, %s41
      %p50 = scmp.eq.s32.totalorder %s19, 11
      %p51 = por %p49, %p50
      %p52 = scmp.ne.s32.totalorder %s41, %s42
      %p53 = scmp.eq.s32.totalorder %s19, 0
      %p54 = por %p52, %p53
      %p55 = scmp.ne.s32.totalorder %s41, %s42
      %p56 = scmp.eq.s32.totalorder %s20, 11
      %p57 = por %p55, %p56
      %p59 = scmp.ne.s32.totalorder %s42, %s58
      %p60 = scmp.eq.s32.totalorder %s20, 0
      %p61 = por %p59, %p60
      %s62 = ssub.s32 %s21, %s33
      %s63 = ssub.s32 %s22, %s29
      %s64 = sor.u32 %s62, %s63
      %p65 = scmp.eq.s32.totalorder %s64, 0
      %s67 = sadd.s32 %s66, 1
      %s68 = scalar_select %p65, %s66, %s67
      %p71 = pneg %p65
      %p72 = scmp.eq.s32.totalorder %s14, 11
      %p73 = por %p71, %p72
      %p74 = scmp.ne.s32.totalorder %s66, %s69
      %p75 = scmp.eq.s32.totalorder %s14, 0
      %p76 = por %p74, %p75
      %p77 = scmp.ne.s32.totalorder %s66, %s69
      %p78 = scmp.eq.s32.totalorder %s19, 11
      %p79 = por %p77, %p78
      %p80 = scmp.ne.s32.totalorder %s69, %s70
      %p81 = scmp.eq.s32.totalorder %s19, 0
      %p82 = por %p80, %p81
      %p83 = scmp.ne.s32.totalorder %s69, %s70
      %p84 = scmp.eq.s32.totalorder %s20, 11
      %p85 = por %p83, %p84
      %p87 = scmp.ne.s32.totalorder %s70, %s86
      %p88 = scmp.eq.s32.totalorder %s20, 0
      %p89 = por %p87, %p88
      %s90 = ssub.s32 %s21, %s33
      %p91 = scmp.eq.s32.totalorder %s90, 0
      %s93 = sadd.s32 %s92, 1
      %s94 = scalar_select %p91, %s92, %s93
      %p97 = pneg %p91
      %p98 = scmp.eq.s32.totalorder %s14, 11
      %p99 = por %p97, %p98
      %p100 = scmp.ne.s32.totalorder %s92, %s95
      %p101 = scmp.eq.s32.totalorder %s14, 0
      %p102 = por %p100, %p101
      %p103 = scmp.ne.s32.totalorder %s92, %s95
      %p104 = scmp.eq.s32.totalorder %s19, 11
      %p105 = por %p103, %p104
      %p106 = scmp.ne.s32.totalorder %s95, %s96
      %p107 = scmp.eq.s32.totalorder %s19, 0
      %p108 = por %p106, %p107
      %p109 = scmp.ne.s32.totalorder %s95, %s96
      %p110 = scmp.eq.s32.totalorder %s20, 11
      %p111 = por %p109, %p110
      %p113 = scmp.ne.s32.totalorder %s96, %s112
      %p114 = scmp.eq.s32.totalorder %s20, 0
      %p115 = por %p113, %p114
      %p116 = scmp.le.s32.totalorder 1, %s14
      %p117 = scmp.lt.s32.totalorder %s14, 13
      %p118 = pnand %p116, %p117
      %p119 = pneg %p118
      // Predicated region
      $region9: #{tpu_custom_call.1} parent=5 // pred_check
        _
      $region10: #{tpu_custom_call.1} parent=5 // pred_check_branch
        %121 = sbr.rel (%p118) target = $region12
      $region11: #{tpu_custom_call.1} parent=5 // pred_region
        %s122 = ssub.s32 %s14, 1
      $region12: #{tpu_custom_call.1} parent=5 // pred_fallthru
        _
      %p123 = scmp.lt.s32.totalorder %s14, 12
      // Predicated region
      $region13: #{tpu_custom_call.1} parent=5 // pred_check
        %p124 = pneg %p123
      $region14: #{tpu_custom_call.1} parent=5 // pred_check_branch
        %126 = sbr.rel (%p124) target = $region16
      $region15: #{tpu_custom_call.1} parent=5 // pred_region
        // Predicated region
        $region17: #{tpu_custom_call.1} parent=15 // pred_check
          %p127 = pneg %p48
        $region18: #{tpu_custom_call.1} parent=15 // pred_check_branch
          %129 = sbr.rel (%p127) target = $region20
        $region19: #{tpu_custom_call.1} parent=15 // pred_region
          %s130 = sand.u32 %s38, 1
          %s131 = scalar_lea.sflag [#allocation3], %s130
          %s132 = sand.u32 %s38, 1
          %s133 = smul.addr %s132, 16
          %s134 = scalar_lea.vmem [#allocation2], %s133
          %s135 = smul.u32 2, %s21
          %s137 = ssub.s32 256, 256
          %138 = vsyncadd %s131, %s137
          %s139 = smul.addr %s135, 3
          %s140 = sadd.s32 %s22, %s139
          %s141 = smul.addr %s140, 128
          %s142 = scalar_lea.hbm %s0, %s141
          %s143 = sshll.u32 %s134, 4
          %s144 = int_to_ptr.vmem [resolvable:$true] %s143
          %149 = dma.hbm_to_vmem [thread:$0]  %s142, 256, %s144, %s131, 384, 128, 8
        $region20: #{tpu_custom_call.1} parent=15 // pred_fallthru
          _
        // Predicated region
        $region21: #{tpu_custom_call.1} parent=15 // pred_check
          %p150 = pneg %p76
        $region22: #{tpu_custom_call.1} parent=15 // pred_check_branch
          %152 = sbr.rel (%p150) target = $region24
        $region23: #{tpu_custom_call.1} parent=15 // pred_region
          %s153 = sand.u32 %s66, 1
          %s154 = scalar_lea.sflag [#allocation5], %s153
          %s155 = sand.u32 %s66, 1
          %s156 = smul.addr %s155, 16
          %s157 = scalar_lea.vmem [#allocation4], %s156
          %s158 = smul.u32 2, %s21
          %s160 = ssub.s32 256, 256
          %161 = vsyncadd %s154, %s160
          %s162 = smul.addr %s158, 3
          %s163 = sadd.s32 %s22, %s162
          %s164 = smul.addr %s163, 128
          %s165 = scalar_lea.hbm %s1, %s164
          %s166 = sshll.u32 %s157, 4
          %s167 = int_to_ptr.vmem [resolvable:$true] %s166
          %172 = dma.hbm_to_vmem [thread:$0]  %s165, 256, %s167, %s154, 384, 128, 8
        $region24: #{tpu_custom_call.1} parent=15 // pred_fallthru
          _
      $region16: #{tpu_custom_call.1} parent=5 // pred_fallthru
        _
      %p173 = scmp.le.s32.totalorder 1, %s14
      %p174 = scmp.lt.s32.totalorder %s14, 13
      %p175 = pnand %p173, %p174
      %p176 = pneg %p175
      // Predicated region
      $region25: #{tpu_custom_call.1} parent=5 // pred_check
        _
      $region26: #{tpu_custom_call.1} parent=5 // pred_check_branch
        %178 = sbr.rel (%p175) target = $region28
      $region27: #{tpu_custom_call.1} parent=5 // pred_region
        %s179 = ssub.s32 %s14, 1
        %s180 = sand.u32 %s41, 1
        %s181 = scalar_lea.sflag [#allocation3], %s180
        %s182 = sand.u32 %s41, 1
        %s183 = smul.addr %s182, 16
        %s184 = scalar_lea.vmem [#allocation2], %s183
        // Predicated region
        $region29: #{tpu_custom_call.1} parent=27 // pred_check
          %p185 = pneg %p54
        $region30: #{tpu_custom_call.1} parent=27 // pred_check_branch
          %187 = sbr.rel (%p185) target = $region32
        $region31: #{tpu_custom_call.1} parent=27 // pred_region
          %188 = dma.done %s181, 256
        $region32: #{tpu_custom_call.1} parent=27 // pred_fallthru
          _
        %s189 = sand.u32 %s69, 1
        %s190 = scalar_lea.sflag [#allocation5], %s189
        %s191 = sand.u32 %s69, 1
        %s192 = smul.addr %s191, 16
        %s193 = scalar_lea.vmem [#allocation4], %s192
        // Predicated region
        $region33: #{tpu_custom_call.1} parent=27 // pred_check
          %p194 = pneg %p82
        $region34: #{tpu_custom_call.1} parent=27 // pred_check_branch
          %196 = sbr.rel (%p194) target = $region36
        $region35: #{tpu_custom_call.1} parent=27 // pred_region
          %197 = dma.done %s190, 256
        $region36: #{tpu_custom_call.1} parent=27 // pred_fallthru
          _
        %s198 = sand.u32 %s41, 1
        %s199 = scalar_lea.sflag [#allocation3], %s198
        %s200 = sand.u32 %s41, 1
        %s201 = smul.addr %s200, 16
        %s202 = scalar_lea.vmem [#allocation2], %s201
        %p203 = pneg %p54
        %p204 = pneg %p51
        %s205 = sand.u32 %s69, 1
        %s206 = scalar_lea.sflag [#allocation5], %s205
        %s207 = sand.u32 %s69, 1
        %s208 = smul.addr %s207, 16
        %s209 = scalar_lea.vmem [#allocation4], %s208
        %p210 = pneg %p82
        %p211 = pneg %p79
        %p212 = pneg %p108
        %p213 = pneg %p105
        %s214 = smul.u32 2, %s23
        %p215 = scmp.lt.s32.totalorder %s214, 7
        %s216 = scalar_select %p215, %s214, 7
        %s217 = smul.addr %s216, 8
        %s218 = scalar_lea.vmem %s2, %s217
        %s219 = smul.u32 2, %s23
        %s220 = smul.u32 2, %s23
        %s221 = smul.u32 2, %s23
        %p222 = scmp.lt.s32.totalorder %s221, 7
        %s223 = scalar_select %p222, %s221, 7
        %s224 = smul.addr %s223, 8
        %s225 = scalar_lea.vmem %s2, %s224
        %s226 = smul.u32 2, %s23
        %p227 = scmp.eq.s32.totalorder %s24, 0
        // Predicated region
        $region37: #{tpu_custom_call.1} parent=27 // pred_check
          %p228 = pneg %p227
        $region38: #{tpu_custom_call.1} parent=27 // pred_check_branch
          %230 = sbr.rel (%p228) target = $region40
        $region39: #{tpu_custom_call.1} parent=27 // pred_region
          %vm231 = vcmask 7168
          %232 = vst.msk [vmem:[%s225] sm:$0xff] %vm231, 0.0
          %233 = vst.msk [vmem:[%s225 + $0x8] sm:$0xff] %vm231, 0.0
        $region40: #{tpu_custom_call.1} parent=27 // pred_fallthru
          _
        %v234 = vld [vmem:[%s184] sm:$0xff]
        %v235 = vld [vmem:[%s184 + $0x8] sm:$0xff]
        %v236 = vmax.f32 %v234, 1e-15
        %v237 = vmax.f32 %v235, 1e-15
        %v238 = vmin.f32 %v236, 1.0
        %v239 = vmin.f32 %v237, 1.0
        %v240 = vld [vmem:[%s193] sm:$0xff]
        %v241 = vld [vmem:[%s193 + $0x8] sm:$0xff]
        %v242 = vmax.f32 %v240, 1e-15
        %v243 = vmax.f32 %v241, 1e-15
        %v244 = vmin.f32 %v242, 1.0
        %v245 = vmin.f32 %v243, 1.0
        %v246 = vld [vmem:[%s225] sm:$0xff]
        %v247 = vld [vmem:[%s225 + $0x8] sm:$0xff]
        %v248 = vlog2.pop %v238
        %v249 = vmul.f32 %v248, 0.6931472
        %v250 = vlog2.pop %v239
        %v251 = vmul.f32 %v250, 0.6931472
        %v252 = vmul.f32 %v244, %v249
        %v253 = vmul.f32 %v245, %v251
        %254 = vadd.xlane.f32.xlu0 %v252
        %v255 = vpop.xlane.xlu0 %254
        %256 = vadd.xlane.f32.xlu0 %v253
        %v257 = vpop.xlane.xlu0 %256
        %v258 = vsub.f32 0.0, %v255
        %v259 = vsub.f32 0.0, %v257
        %v260 = vadd.f32 %v246, %v258
        %v261 = vadd.f32 %v247, %v259
        %vm262 = vcmask 7168
        %263 = vst.msk [vmem:[%s225] sm:$0xff] %vm262, %v260
        %264 = vst.msk [vmem:[%s225 + $0x8] sm:$0xff] %vm262, %v261
        %s265 = smul.u32 2, %s23
        %p266 = scmp.lt.s32.totalorder %s265, 7
        %s267 = scalar_select %p266, %s265, 7
        %s268 = smul.addr %s267, 8
        %s269 = scalar_lea.vmem %s2, %s268
        // Predicated region
        $region41: #{tpu_custom_call.1} parent=27 // pred_check
          %p270 = pneg %p105
        $region42: #{tpu_custom_call.1} parent=27 // pred_check_branch
          %272 = sbr.rel (%p270) target = $region44
        $region43: #{tpu_custom_call.1} parent=27 // pred_region
          %s273 = smul.u32 2, %s23
        $region44: #{tpu_custom_call.1} parent=27 // pred_fallthru
          _
      $region28: #{tpu_custom_call.1} parent=5 // pred_fallthru
        _
      %p274 = scmp.le.s32.totalorder 2, %s14
      // Predicated region
      $region45: #{tpu_custom_call.1} parent=5 // pred_check
        %p275 = pneg %p274
      $region46: #{tpu_custom_call.1} parent=5 // pred_check_branch
        %277 = sbr.rel (%p275) target = $region48
      $region47: #{tpu_custom_call.1} parent=5 // pred_region
        %s278 = ssub.s32 %s14, 2
        // Predicated region
        $region49: #{tpu_custom_call.1} parent=47 // pred_check
          %p279 = pneg %p111
        $region50: #{tpu_custom_call.1} parent=47 // pred_check_branch
          %281 = sbr.rel (%p279) target = $region52
        $region51: #{tpu_custom_call.1} parent=47 // pred_region
          %s282 = smul.u32 2, %s25
          %p283 = scmp.lt.s32.totalorder %s282, 7
          %s284 = scalar_select %p283, %s282, 7
          %s285 = smul.addr %s284, 8
          %s286 = scalar_lea.vmem %s2, %s285
        $region52: #{tpu_custom_call.1} parent=47 // pred_fallthru
          _
      $region48: #{tpu_custom_call.1} parent=5 // pred_fallthru
        _
    $region6: #{tpu_custom_call.1} parent=1 // loop_footer
      %s18 = sadd.s32 1, %s14
    $region7: #{tpu_custom_call.1} parent=1 // loop_footer_branch
      %13 = sbr.rel target = $region3
    $region8: #{tpu_custom_call.1} parent=1 // loop_exit
      _
    %287 = vsyncpa [#allocation3], 1
    %s288 = scalar_lea.sflag [#allocation3], 1
    %289 = vsyncpa %s288, 1
    %290 = vsyncpa [#allocation5], 1
    %s291 = scalar_lea.sflag [#allocation5], 1
    %292 = vsyncpa %s291, 1

</llo_original>
